<compile_context>
chip_gen: v7x
topology: tpu7x:2x2x1
jax: 0.10.0
libtpu: 0.0.40
codegen_flags: <defaults>
</compile_context>

<pallas_src>
import functools

import jax
import jax.numpy as jnp
from jax.experimental import pallas as pl
from jax.experimental.pallas import tpu as pltpu

DIGIT_LEN = 15
HIDDEN1 = 300
HIDDEN2 = 100
LANE = 128


def _round_up(n, m):
    return ((n + m - 1) // m) * m


D_PAD = _round_up(DIGIT_LEN, LANE)   # 128
H1_PAD = _round_up(HIDDEN1, LANE)    # 384
H2_PAD = _round_up(HIDDEN2, LANE)    # 128


def coachnet_kernel(ds_len,
                    x_ref, w1_ref, b1_ref,
                    w2_ref, b2_ref,
                    w3_ref, b3_ref,
                    a1_ref, a2_ref,
                    o_ref, xpad_ref):
    # Lane-pad the (TB, 15) f32 input tile to (TB, 128) bf16 in VMEM so the
    # matmul tiles stay MXU-aligned while HBM only streams the 15 real lanes.
    # Re-zeroed every step -> no cross-step scratch state (megacore-safe).
    xpad_ref[...] = jnp.zeros(xpad_ref.shape, jnp.bfloat16)
    xpad_ref[:, :DIGIT_LEN] = x_ref[...].astype(jnp.bfloat16)
    x = xpad_ref[...]

    # Linear(digit_len -> hidden1)   [Dropout = identity in eval]
    h = jnp.dot(x, w1_ref[...], preferred_element_type=jnp.float32)
    h = h + b1_ref[...]
    a1 = a1_ref[0, 0]                       # PReLU single shared slope (f32)
    h = jnp.where(h >= 0.0, h, a1 * h)

    # Linear(hidden1 -> hidden2)     [Dropout = identity in eval]
    h = jnp.dot(h.astype(jnp.bfloat16), w2_ref[...],
                preferred_element_type=jnp.float32)
    h = h + b2_ref[...]
    a2 = a2_ref[0, 0]
    h = jnp.where(h >= 0.0, h, a2 * h)

    # Linear(hidden2 -> ds_len): padded logit lanes get -1e30 from b3, so
    # they vanish in the softmax with no explicit iota/where mask.
    logits = jnp.dot(h.astype(jnp.bfloat16), w3_ref[...],
                     preferred_element_type=jnp.float32)
    logits = logits + b3_ref[...]

    # softmax over dim=1
    m = jnp.max(logits, axis=-1, keepdims=True)
    e = jnp.exp(logits - m)
    denom = jnp.sum(e, axis=-1, keepdims=True)
    probs = e * pl.reciprocal(denom, approx=True)

    # Store only the ds_len real lanes (unpadded HBM writeback).
    o_ref[...] = probs[:, :ds_len]


def prepare_params(params):
    """One-time weight padding / bf16 casts (hoisted off the per-call path)."""
    def pad2(a, rows, cols, dtype, fill=0.0):
        buf = jnp.full((rows, cols), fill, dtype)
        return buf.at[: a.shape[0], : a.shape[1]].set(a.astype(dtype))

    ds_len = params["w3"].shape[1]
    ds_pad = _round_up(ds_len, LANE)
    return dict(
        w1=pad2(params["w1"], D_PAD, H1_PAD, jnp.bfloat16),
        b1=pad2(params["b1"], 1, H1_PAD, jnp.float32),
        a1=params["a1"].reshape(1, 1).astype(jnp.float32),
        w2=pad2(params["w2"], H1_PAD, H2_PAD, jnp.bfloat16),
        b2=pad2(params["b2"], 1, H2_PAD, jnp.float32),
        a2=params["a2"].reshape(1, 1).astype(jnp.float32),
        w3=pad2(params["w3"], H2_PAD, ds_pad, jnp.bfloat16),
        # Bake the padded-logit mask into the bias: padded lanes -> -1e30.
        b3=pad2(params["b3"], 1, ds_pad, jnp.float32, fill=-1e30),
    )


def _pick_tile(batch, tb):
    """Rows per grid step. Ensures >=2 grid steps for non-trivial batches so
    dimension_semantics=("parallel",) can use both v7x TensorCores."""
    b8 = _round_up(batch, 8)
    if b8 <= 8:
        return 8
    if b8 <= tb:
        return _round_up((b8 + 1) // 2, 8)   # split a single tile in two
    return tb


@functools.partial(jax.jit, static_argnames=("ds_len", "tb"))
def coachnet_forward(x, prepared, *, ds_len, tb=2048):
    """x: [B, DIGIT_LEN] float32 -> softmax probs [B, ds_len] float32."""
    B = x.shape[0]
    ds_pad = prepared["w3"].shape[1]

    tb = _round_up(tb, 8)
    TB = _pick_tile(B, tb)
    B_pad = _round_up(B, TB)
    xp = x if B_pad == B else jnp.pad(x, ((0, B_pad - B), (0, 0)))

    grid = (B_pad // TB,)

    def resident(shape):
        # Weights/biases: same block every grid step -> stay VMEM-resident.
        # TODO(synk): pipeline_mode=pl.Buffered(1) would halve their buffers
        # on v7x; skipped since VMEM is not binding at TB<=2048.
        return pl.BlockSpec(shape, lambda i: (0, 0))

    smem_spec = pl.BlockSpec(memory_space=pltpu.MemorySpace.SMEM)

    out = pl.pallas_call(
        functools.partial(coachnet_kernel, ds_len),
        out_shape=jax.ShapeDtypeStruct((B_pad, ds_len), jnp.float32),
        grid=grid,
        in_specs=[
            pl.BlockSpec((TB, DIGIT_LEN), lambda i: (i, 0)),     # x (15 lanes)
            resident((D_PAD, H1_PAD)), resident((1, H1_PAD)),    # w1, b1
            resident((H1_PAD, H2_PAD)), resident((1, H2_PAD)),   # w2, b2
            resident((H2_PAD, ds_pad)), resident((1, ds_pad)),   # w3, b3
            smem_spec, smem_spec,                                # PReLU slopes
        ],
        out_specs=pl.BlockSpec((TB, ds_len), lambda i: (i, 0)),
        scratch_shapes=[pltpu.VMEM((TB, D_PAD), jnp.bfloat16)],  # lane-pad buf
        compiler_params=pltpu.CompilerParams(
            dimension_semantics=("parallel",),
            vmem_limit_bytes=32 * 1024 * 1024),
    )(xp, prepared["w1"], prepared["b1"], prepared["w2"], prepared["b2"],
      prepared["w3"], prepared["b3"], prepared["a1"], prepared["a2"])

    return out if B_pad == B else out[:B]


def init_params(key, ds_len):
    """Deterministic init mimicking PyTorch Linear default U(-1/sqrt(fan_in), +)."""
    def linear(key, fan_in, fan_out):
        kw, kb = jax.random.split(key)
        bound = 1.0 / jnp.sqrt(jnp.float32(fan_in))
        w = jax.random.uniform(kw, (fan_in, fan_out), jnp.float32, -bound, bound)
        b = jax.random.uniform(kb, (1, fan_out), jnp.float32, -bound, bound)
        return w, b

    k1, k2, k3 = jax.random.split(key, 3)
    w1, b1 = linear(k1, DIGIT_LEN, HIDDEN1)
    w2, b2 = linear(k2, HIDDEN1, HIDDEN2)
    w3, b3 = linear(k3, HIDDEN2, ds_len)
    # PReLU default: single shared parameter initialized to 0.25
    a1 = jnp.full((1,), 0.25, jnp.float32)
    a2 = jnp.full((1,), 0.25, jnp.float32)
    return dict(w1=w1, b1=b1, a1=a1, w2=w2, b2=b2, a2=a2, w3=w3, b3=b3)


def reference_forward(x, p):
    h = x @ p["w1"] + p["b1"]
    h = jnp.where(h >= 0, h, p["a1"][0] * h)
    h = h @ p["w2"] + p["b2"]
    h = jnp.where(h >= 0, h, p["a2"][0] * h)
    logits = h @ p["w3"] + p["b3"]
    return jax.nn.softmax(logits, axis=1)


if __name__ == "__main__":
    key = jax.random.PRNGKey(0)
    k_param, k_x1, k_x2 = jax.random.split(key, 3)

    ds_len = 32
    params = init_params(k_param, ds_len)
    prepared = jax.block_until_ready(prepare_params(params))   # one-time pad/cast

    # Small batch: single grid step.
    x_small = jax.random.normal(k_x1, (8, DIGIT_LEN), jnp.float32)
    out_small = jax.block_until_ready(
        coachnet_forward(x_small, prepared, ds_len=ds_len))
    ref_small = reference_forward(x_small, params)
    assert out_small.shape == (8, ds_len)
    assert jnp.allclose(out_small, ref_small, atol=2e-2, rtol=0)
    assert jnp.allclose(jnp.sum(out_small, axis=1), jnp.ones((8,)), atol=5e-3)

    # Ragged batch exercising the batch grid:
    #   default tb -> 2 steps of 152 rows (2-TC split); tb=64 -> 5 steps.
    x_big = jax.random.normal(k_x2, (300, DIGIT_LEN), jnp.float32)
    ref_big = reference_forward(x_big, params)
    for tb in (2048, 64):
        out_big = jax.block_until_ready(
            coachnet_forward(x_big, prepared, ds_len=ds_len, tb=tb))
        assert out_big.shape == (300, ds_len)
        assert jnp.allclose(out_big, ref_big, atol=2e-2, rtol=0)
        assert jnp.allclose(jnp.sum(out_big, axis=1), jnp.ones((300,)), atol=5e-3)

    print("KERNEL_OK")
</pallas_src>

<mosaic_0001>
module attributes {stable_mosaic.version = 11 : i64} {
  func.func @coachnet_kernel(%arg0: i32, %arg1: memref<8x15xf32, #tpu.memory_space<vmem>>, %arg2: memref<128x384xbf16, #tpu.memory_space<vmem>>, %arg3: memref<1x384xf32, #tpu.memory_space<vmem>>, %arg4: memref<384x128xbf16, #tpu.memory_space<vmem>>, %arg5: memref<1x128xf32, #tpu.memory_space<vmem>>, %arg6: memref<128x128xbf16, #tpu.memory_space<vmem>>, %arg7: memref<1x128xf32, #tpu.memory_space<vmem>>, %arg8: memref<1x1xf32, #tpu.memory_space<smem>>, %arg9: memref<1x1xf32, #tpu.memory_space<smem>>, %arg10: memref<8x32xf32, #tpu.memory_space<vmem>>, %arg11: memref<8x128xbf16, #tpu.memory_space<vmem>>) attributes {dimension_semantics = [#tpu.dimension_semantics<parallel>], iteration_bounds = array<i64: 1>, scalar_prefetch = 0 : i64, scratch_operands = 1 : i64, tpu.core_type = #tpu.core_type<tc>, window_params = [{transform_indices = @transform_0, window_bounds = array<i64: 8, 15>}, {pipeline_mode = #tpu.pipeline_mode<synchronous>, transform_indices = @transform_1, window_bounds = array<i64: 128, 384>}, {pipeline_mode = #tpu.pipeline_mode<synchronous>, transform_indices = @transform_2, window_bounds = array<i64: 1, 384>}, {pipeline_mode = #tpu.pipeline_mode<synchronous>, transform_indices = @transform_3, window_bounds = array<i64: 384, 128>}, {pipeline_mode = #tpu.pipeline_mode<synchronous>, transform_indices = @transform_4, window_bounds = array<i64: 1, 128>}, {pipeline_mode = #tpu.pipeline_mode<synchronous>, transform_indices = @transform_5, window_bounds = array<i64: 128, 128>}, {pipeline_mode = #tpu.pipeline_mode<synchronous>, transform_indices = @transform_6, window_bounds = array<i64: 1, 128>}, {transform_indices = @transform_7, window_bounds = array<i64: 1, 1>}, {transform_indices = @transform_8, window_bounds = array<i64: 1, 1>}, {transform_indices = @transform_9, window_bounds = array<i64: 8, 32>}]} {
    %cst = arith.constant 0.000000e+00 : bf16
    %0 = vector.broadcast %cst : bf16 to vector<8x128xbf16>
    %c0 = arith.constant 0 : index
    %c0_0 = arith.constant 0 : index
    %1 = vector.load %arg11[%c0, %c0_0] : memref<8x128xbf16, #tpu.memory_space<vmem>>, vector<8x128xbf16>
    tpu.vector_store %arg11[%c0, %c0_0], %0 {strides = array<i32>} : memref<8x128xbf16, #tpu.memory_space<vmem>>, vector<8x128xbf16>,
    %c0_1 = arith.constant 0 : index
    %c0_2 = arith.constant 0 : index
    %2 = vector.load %arg1[%c0_1, %c0_2] : memref<8x15xf32, #tpu.memory_space<vmem>>, vector<8x15xf32>
    %3 = arith.truncf %2 : vector<8x15xf32> to vector<8x15xbf16>
    %c0_3 = arith.constant 0 : index
    %c0_4 = arith.constant 0 : index
    %4 = vector.load %arg11[%c0_3, %c0_4] : memref<8x128xbf16, #tpu.memory_space<vmem>>, vector<8x15xbf16>
    tpu.vector_store %arg11[%c0_3, %c0_4], %3 {strides = array<i32>} : memref<8x128xbf16, #tpu.memory_space<vmem>>, vector<8x15xbf16>,
    %c0_5 = arith.constant 0 : index
    %c0_6 = arith.constant 0 : index
    %5 = vector.load %arg11[%c0_5, %c0_6] : memref<8x128xbf16, #tpu.memory_space<vmem>>, vector<8x128xbf16>
    %c0_7 = arith.constant 0 : index
    %c0_8 = arith.constant 0 : index
    %6 = vector.load %arg2[%c0_7, %c0_8] : memref<128x384xbf16, #tpu.memory_space<vmem>>, vector<128x384xbf16>
    %cst_9 = arith.constant dense<0.000000e+00> : vector<8x384xf32>
    %7 = tpu.matmul %5, %6, %cst_9 {dimension_numbers = #tpu.dot_dimension_numbers<[1], [0], [0], [1], [0, 0, 1, 1], [], []>} : vector<8x128xbf16>, vector<128x384xbf16>, vector<8x384xf32> -> vector<8x384xf32>
    %c0_10 = arith.constant 0 : index
    %c0_11 = arith.constant 0 : index
    %8 = vector.load %arg3[%c0_10, %c0_11] : memref<1x384xf32, #tpu.memory_space<vmem>>, vector<1x384xf32>
    %9 = vector.broadcast %8 : vector<1x384xf32> to vector<8x384xf32>
    %10 = arith.addf %7, %9 : vector<8x384xf32>
    %c0_12 = arith.constant 0 : index
    %c0_13 = arith.constant 0 : index
    %11 = memref.load %arg8[%c0_12, %c0_13] : memref<1x1xf32, #tpu.memory_space<smem>>
    %cst_14 = arith.constant 0.000000e+00 : f32
    %12 = vector.broadcast %cst_14 : f32 to vector<8x384xf32>
    %13 = arith.cmpf oge, %10, %12 : vector<8x384xf32>
    %14 = vector.broadcast %11 : f32 to vector<8x384xf32>
    %15 = arith.mulf %14, %10 : vector<8x384xf32>
    %16 = arith.select %13, %10, %15 : vector<8x384xi1>, vector<8x384xf32>
    %17 = arith.truncf %16 : vector<8x384xf32> to vector<8x384xbf16>
    %c0_15 = arith.constant 0 : index
    %c0_16 = arith.constant 0 : index
    %18 = vector.load %arg4[%c0_15, %c0_16] : memref<384x128xbf16, #tpu.memory_space<vmem>>, vector<384x128xbf16>
    %cst_17 = arith.constant dense<0.000000e+00> : vector<8x128xf32>
    %19 = tpu.matmul %17, %18, %cst_17 {dimension_numbers = #tpu.dot_dimension_numbers<[1], [0], [0], [1], [0, 0, 1, 1], [], []>} : vector<8x384xbf16>, vector<384x128xbf16>, vector<8x128xf32> -> vector<8x128xf32>
    %c0_18 = arith.constant 0 : index
    %c0_19 = arith.constant 0 : index
    %20 = vector.load %arg5[%c0_18, %c0_19] : memref<1x128xf32, #tpu.memory_space<vmem>>, vector<1x128xf32>
    %21 = vector.broadcast %20 : vector<1x128xf32> to vector<8x128xf32>
    %22 = arith.addf %19, %21 : vector<8x128xf32>
    %c0_20 = arith.constant 0 : index
    %c0_21 = arith.constant 0 : index
    %23 = memref.load %arg9[%c0_20, %c0_21] : memref<1x1xf32, #tpu.memory_space<smem>>
    %cst_22 = arith.constant 0.000000e+00 : f32
    %24 = vector.broadcast %cst_22 : f32 to vector<8x128xf32>
    %25 = arith.cmpf oge, %22, %24 : vector<8x128xf32>
    %26 = vector.broadcast %23 : f32 to vector<8x128xf32>
    %27 = arith.mulf %26, %22 : vector<8x128xf32>
    %28 = arith.select %25, %22, %27 : vector<8x128xi1>, vector<8x128xf32>
    %29 = arith.truncf %28 : vector<8x128xf32> to vector<8x128xbf16>
    %c0_23 = arith.constant 0 : index
    %c0_24 = arith.constant 0 : index
    %30 = vector.load %arg6[%c0_23, %c0_24] : memref<128x128xbf16, #tpu.memory_space<vmem>>, vector<128x128xbf16>
    %cst_25 = arith.constant dense<0.000000e+00> : vector<8x128xf32>
    %31 = tpu.matmul %29, %30, %cst_25 {dimension_numbers = #tpu.dot_dimension_numbers<[1], [0], [0], [1], [0, 0, 1, 1], [], []>} : vector<8x128xbf16>, vector<128x128xbf16>, vector<8x128xf32> -> vector<8x128xf32>
    %c0_26 = arith.constant 0 : index
    %c0_27 = arith.constant 0 : index
    %32 = vector.load %arg7[%c0_26, %c0_27] : memref<1x128xf32, #tpu.memory_space<vmem>>, vector<1x128xf32>
    %33 = vector.broadcast %32 : vector<1x128xf32> to vector<8x128xf32>
    %34 = arith.addf %31, %33 : vector<8x128xf32>
    %cst_28 = arith.constant dense<0xFF800000> : vector<8xf32>
    %35 = vector.multi_reduction <maximumf>, %34, %cst_28 [1] : vector<8x128xf32> to vector<8xf32>
    %36 = vector.shape_cast %35 : vector<8xf32> to vector<8x1xf32>
    %37 = vector.broadcast %36 : vector<8x1xf32> to vector<8x128xf32>
    %38 = arith.subf %34, %37 : vector<8x128xf32>
    %39 = math.exp %38 : vector<8x128xf32>
    %cst_29 = arith.constant dense<0.000000e+00> : vector<8xf32>
    %40 = vector.multi_reduction <add>, %39, %cst_29 [1] : vector<8x128xf32> to vector<8xf32>
    %41 = vector.shape_cast %40 : vector<8xf32> to vector<8x1xf32>
    %42 = tpu.reciprocal %41 {approx = true} : vector<8x1xf32> -> vector<8x1xf32>
    %43 = vector.broadcast %42 : vector<8x1xf32> to vector<8x128xf32>
    %44 = arith.mulf %39, %43 : vector<8x128xf32>
    %45 = vector.extract_strided_slice %44 {offsets = [0, 0], sizes = [8, 32], strides = [1, 1]} : vector<8x128xf32> to vector<8x32xf32>
    %c0_30 = arith.constant 0 : index
    %c0_31 = arith.constant 0 : index
    %46 = vector.load %arg10[%c0_30, %c0_31] : memref<8x32xf32, #tpu.memory_space<vmem>>, vector<8x32xf32>
    tpu.vector_store %arg10[%c0_30, %c0_31], %45 {strides = array<i32>} : memref<8x32xf32, #tpu.memory_space<vmem>>, vector<8x32xf32>,
    return
  }
  func.func @transform_0(%arg0: i32) -> (i32, i32) {
    %c0_i32 = arith.constant 0 : i32
    %c0_i32_0 = arith.constant 0 : i32
    return %arg0, %c0_i32 : i32, i32
  }
  func.func @transform_1(%arg0: i32) -> (i32, i32) {
    %c0_i32 = arith.constant 0 : i32
    %c0_i32_0 = arith.constant 0 : i32
    %c0_i32_1 = arith.constant 0 : i32
    return %c0_i32, %c0_i32_0 : i32, i32
  }
  func.func @transform_2(%arg0: i32) -> (i32, i32) {
    %c0_i32 = arith.constant 0 : i32
    %c0_i32_0 = arith.constant 0 : i32
    %c0_i32_1 = arith.constant 0 : i32
    return %c0_i32, %c0_i32_0 : i32, i32
  }
  func.func @transform_3(%arg0: i32) -> (i32, i32) {
    %c0_i32 = arith.constant 0 : i32
    %c0_i32_0 = arith.constant 0 : i32
    %c0_i32_1 = arith.constant 0 : i32
    return %c0_i32, %c0_i32_0 : i32, i32
  }
  func.func @transform_4(%arg0: i32) -> (i32, i32) {
    %c0_i32 = arith.constant 0 : i32
    %c0_i32_0 = arith.constant 0 : i32
    %c0_i32_1 = arith.constant 0 : i32
    return %c0_i32, %c0_i32_0 : i32, i32
  }
  func.func @transform_5(%arg0: i32) -> (i32, i32) {
    %c0_i32 = arith.constant 0 : i32
    %c0_i32_0 = arith.constant 0 : i32
    %c0_i32_1 = arith.constant 0 : i32
    return %c0_i32, %c0_i32_0 : i32, i32
  }
  func.func @transform_6(%arg0: i32) -> (i32, i32) {
    %c0_i32 = arith.constant 0 : i32
    %c0_i32_0 = arith.constant 0 : i32
    %c0_i32_1 = arith.constant 0 : i32
    return %c0_i32, %c0_i32_0 : i32, i32
  }
  func.func @transform_7(%arg0: i32) -> (i32, i32) {
    %c0_i32 = arith.constant 0 : i32
    %c0_i32_0 = arith.constant 0 : i32
    %c0_i32_1 = arith.constant 0 : i32
    return %c0_i32, %c0_i32_0 : i32, i32
  }
  func.func @transform_8(%arg0: i32) -> (i32, i32) {
    %c0_i32 = arith.constant 0 : i32
    %c0_i32_0 = arith.constant 0 : i32
    %c0_i32_1 = arith.constant 0 : i32
    return %c0_i32, %c0_i32_0 : i32, i32
  }
  func.func @transform_9(%arg0: i32) -> (i32, i32) {
    %c0_i32 = arith.constant 0 : i32
    %c0_i32_0 = arith.constant 0 : i32
    return %arg0, %c0_i32 : i32, i32
  }
}

</mosaic_0001>

<llo_original>
// kernel: coachnet_forward.1
$region0: #{coachnet_forward.1}
  #allocation0 [shape = 'u32[]', space=smem, size = 0x4, offset = 0x4, fixed_abs, tag = 'smem constant byte address 0x4 - core index']
  #allocation1 [shape = 'u32[144,128]{1,0:T(1,128)}', space=vmem, size = 0x12000, scoped, tag = 'internal scratch']
  #allocation2 [shape = 'bf16[8,128]{1,0:T(8,128)(2,1)}', space=vmem, size = 0x800, scoped, tag = 'scratch operand']
  #allocation3 [shape = 'f32[1,1]{1,0:T(1,128)S(6)}', space=smem, size = 0x200, scoped, tag = 'scoped memory for coachnet_forward.1']
  #allocation4 [shape = 'f32[1,1]{1,0:T(1,128)S(6)}', space=smem, size = 0x200, scoped, tag = 'scoped memory for coachnet_forward.1']
  %s0 = inlined_call_operand.hbm [shape: f32[8,15], index: 0, kind: input, shape index: {}]
  %s1 = inlined_call_operand.hbm [shape: bf16[128,384], index: 1, kind: input, shape index: {}]
  %s2 = inlined_call_operand.vmem [shape: f32[1,384], index: 2, kind: input, shape index: {}]
  %s3 = inlined_call_operand.hbm [shape: bf16[384,128], index: 3, kind: input, shape index: {}]
  %s4 = inlined_call_operand.vmem [shape: f32[1,128], index: 4, kind: input, shape index: {}]
  %s5 = inlined_call_operand.hbm [shape: bf16[128,128], index: 5, kind: input, shape index: {}]
  %s6 = inlined_call_operand.vmem [shape: f32[1,128], index: 6, kind: input, shape index: {}]
  %s7 = inlined_call_operand.<no memory space> [shape: f32[1,1], index: 7, kind: input, shape index: {}]
  %s8 = inlined_call_operand.<no memory space> [shape: f32[1,1], index: 8, kind: input, shape index: {}]
  %s9 = inlined_call_operand.hbm [shape: f32[8,32], index: 9, kind: output, shape index: {}]
  %s10 = sld [smem:[#allocation0]]
  $region62: #{coachnet_forward.1} parent=0
    _
  %s12 = ssub.s32 1, %s10
  %s13 = scalar_select 0, %s12, %s10
  %14 = sst [smem:[#allocation3]] %s7
  %15 = sst [smem:[#allocation4]] %s8
  $region1: #{coachnet_forward.1} parent=0
    #allocation5 [shape = 'u8[4096]{0}', space=vmem, size = 0x1000, scoped, tag = 'input window, operand 0, single buffered']
    #allocation6 [shape = 's32[1]{0}', space=sflag, size = 0x4, scoped, tag = 'scoped memory for coachnet_forward.1']
    #allocation7 [shape = 's32[1]{0}', space=sflag, size = 0x4, scoped, tag = 'scoped memory for coachnet_forward.1']
    #allocation8 [shape = 'u8[98304]{0}', space=vmem, size = 0x18000, scoped, tag = 'input window, operand 1, single buffered']
    #allocation9 [shape = 's32[1]{0}', space=sflag, size = 0x4, scoped, tag = 'scoped memory for coachnet_forward.1']
    #allocation10 [shape = 'u8[98304]{0}', space=vmem, size = 0x18000, scoped, tag = 'input window, operand 3, single buffered']
    #allocation11 [shape = 'u8[32768]{0}', space=vmem, size = 0x8000, scoped, tag = 'input window, operand 5, single buffered']
    #allocation12 [shape = 's32[1]{0}', space=sflag, size = 0x4, scoped, tag = 'scoped memory for coachnet_forward.1']
    #allocation13 [shape = 'u8[4096]{0}', space=vmem, size = 0x1000, scoped, tag = 'output window, operand 0, single buffered']
    %16 = vsyncpa [#allocation6], 0
    %17 = vsyncpa [#allocation9], 0
    %18 = vsyncpa [#allocation12], 0
    %19 = vsyncpa [#allocation7], 0
    // Predicated region
    $region2: #{coachnet_forward.1} parent=1 // pred_check
      _
    $region3: #{coachnet_forward.1} parent=1 // pred_check_branch
      %21 = sbr.rel (0) target = $region5
    $region4: #{coachnet_forward.1} parent=1 // pred_region
      %s23 = ssub.s32 128, 128
      %24 = vsyncadd [#allocation6], %s23
      %s26 = sshll.u32 [#allocation5], 4
      %s27 = int_to_ptr.vmem [resolvable:$true] %s26
      %29 = dma.hbm_to_vmem [thread:$0]  %s0, 128, %s27, [#allocation6]
    $region5: #{coachnet_forward.1} parent=1 // pred_fallthru
      _
    // Predicated region
    $region6: #{coachnet_forward.1} parent=1 // pred_check
      _
    $region7: #{coachnet_forward.1} parent=1 // pred_check_branch
      %31 = sbr.rel (0) target = $region9
    $region8: #{coachnet_forward.1} parent=1 // pred_region
      %s33 = ssub.s32 3072, 3072
      %34 = vsyncadd [#allocation9], %s33
      %s35 = sshll.u32 [#allocation8], 4
      %s36 = int_to_ptr.vmem [resolvable:$true] %s35
      %41 = dma.hbm_to_vmem [thread:$0]  %s1, 3072, %s36, [#allocation9], 192, 192, 12
    $region9: #{coachnet_forward.1} parent=1 // pred_fallthru
      _
    // Predicated region
    $region10: #{coachnet_forward.1} parent=1 // pred_check
      _
    $region11: #{coachnet_forward.1} parent=1 // pred_check_branch
      %43 = sbr.rel (0) target = $region13
    $region12: #{coachnet_forward.1} parent=1 // pred_region
      _
    $region13: #{coachnet_forward.1} parent=1 // pred_fallthru
      _
    // Predicated region
    $region14: #{coachnet_forward.1} parent=1 // pred_check
      _
    $region15: #{coachnet_forward.1} parent=1 // pred_check_branch
      %45 = sbr.rel (0) target = $region17
    $region16: #{coachnet_forward.1} parent=1 // pred_region
      %s47 = ssub.s32 3072, 3072
      %48 = vsyncadd [#allocation9], %s47
      %s49 = sshll.u32 [#allocation10], 4
      %s50 = int_to_ptr.vmem [resolvable:$true] %s49
      %55 = dma.hbm_to_vmem [thread:$0]  %s3, 3072, %s50, [#allocation9], 64, 64, 4
    $region17: #{coachnet_forward.1} parent=1 // pred_fallthru
      _
    // Predicated region
    $region18: #{coachnet_forward.1} parent=1 // pred_check
      _
    $region19: #{coachnet_forward.1} parent=1 // pred_check_branch
      %57 = sbr.rel (0) target = $region21
    $region20: #{coachnet_forward.1} parent=1 // pred_region
      _
    $region21: #{coachnet_forward.1} parent=1 // pred_fallthru
      _
    // Predicated region
    $region22: #{coachnet_forward.1} parent=1 // pred_check
      _
    $region23: #{coachnet_forward.1} parent=1 // pred_check_branch
      %59 = sbr.rel (0) target = $region25
    $region24: #{coachnet_forward.1} parent=1 // pred_region
      %s61 = ssub.s32 1024, 1024
      %62 = vsyncadd [#allocation12], %s61
      %s63 = sshll.u32 [#allocation11], 4
      %s64 = int_to_ptr.vmem [resolvable:$true] %s63
      %69 = dma.hbm_to_vmem [thread:$0]  %s5, 1024, %s64, [#allocation12], 64, 64, 4
    $region25: #{coachnet_forward.1} parent=1 // pred_fallthru
      _
    // Predicated region
    $region26: #{coachnet_forward.1} parent=1 // pred_check
      _
    $region27: #{coachnet_forward.1} parent=1 // pred_check_branch
      %71 = sbr.rel (0) target = $region29
    $region28: #{coachnet_forward.1} parent=1 // pred_region
      _
    $region29: #{coachnet_forward.1} parent=1 // pred_fallthru
      _
    // Predicated region
    $region30: #{coachnet_forward.1} parent=1 // pred_check
      _
    $region31: #{coachnet_forward.1} parent=1 // pred_check_branch
      %73 = sbr.rel (0) target = $region33
    $region32: #{coachnet_forward.1} parent=1 // pred_region
      _
    $region33: #{coachnet_forward.1} parent=1 // pred_fallthru
      _
    // Predicated region
    $region34: #{coachnet_forward.1} parent=1 // pred_check
      _
    $region35: #{coachnet_forward.1} parent=1 // pred_check_branch
      %75 = sbr.rel (0) target = $region37
    $region36: #{coachnet_forward.1} parent=1 // pred_region
      _
    $region37: #{coachnet_forward.1} parent=1 // pred_fallthru
      _
    // Predicated region
    $region38: #{coachnet_forward.1} parent=1 // pred_check
      _
    $region39: #{coachnet_forward.1} parent=1 // pred_check_branch
      %77 = sbr.rel (0) target = $region41
    $region40: #{coachnet_forward.1} parent=1 // pred_region
      %78 = dma.done [#allocation6], 128
    $region41: #{coachnet_forward.1} parent=1 // pred_fallthru
      _
    // Predicated region
    $region42: #{coachnet_forward.1} parent=1 // pred_check
      _
    $region43: #{coachnet_forward.1} parent=1 // pred_check_branch
      %80 = sbr.rel (0) target = $region45
    $region44: #{coachnet_forward.1} parent=1 // pred_region
      %81 = dma.done [#allocation9], 3072
    $region45: #{coachnet_forward.1} parent=1 // pred_fallthru
      _
    // Predicated region
    $region46: #{coachnet_forward.1} parent=1 // pred_check
      _
    $region47: #{coachnet_forward.1} parent=1 // pred_check_branch
      %83 = sbr.rel (0) target = $region49
    $region48: #{coachnet_forward.1} parent=1 // pred_region
      %84 = dma.done [#allocation9], 3072
    $region49: #{coachnet_forward.1} parent=1 // pred_fallthru
      _
    // Predicated region
    $region50: #{coachnet_forward.1} parent=1 // pred_check
      _
    $region51: #{coachnet_forward.1} parent=1 // pred_check_branch
      %86 = sbr.rel (0) target = $region53
    $region52: #{coachnet_forward.1} parent=1 // pred_region
      %87 = dma.done [#allocation12], 1024
    $region53: #{coachnet_forward.1} parent=1 // pred_fallthru
      _
    %89 = vst [vmem:[#allocation2] sm:$0xf] 0
    %v90 = vld [vmem:[#allocation5] sm:$0xff]
    %v91 = vpack.c.bf16 %v90, %v90
    %vm92 = vcmask 117760
    %93 = vst.msk [vmem:[#allocation2] sm:$0xf] %vm92, %v91
    %v94 = vld [vmem:[#allocation2] sm:$0xf]
    %v95 = vld [vmem:[#allocation8] sm:$0xff]
    %v96 = vld [vmem:[#allocation8 + $0x8] sm:$0xf]
    %v97 = vld [vmem:[#allocation8 + $0xc] sm:$0xff]
    %v98 = vld [vmem:[#allocation8 + $0x14] sm:$0xf]
    %v99 = vld [vmem:[#allocation8 + $0x18] sm:$0xff]
    %v100 = vld [vmem:[#allocation8 + $0x20] sm:$0xf]
    %v101 = vld [vmem:[#allocation8 + $0x24] sm:$0xff]
    %v102 = vld [vmem:[#allocation8 + $0x2c] sm:$0xf]
    %v103 = vld [vmem:[#allocation8 + $0x30] sm:$0xff]
    %v104 = vld [vmem:[#allocation8 + $0x38] sm:$0xf]
    %v105 = vld [vmem:[#allocation8 + $0x3c] sm:$0xff]
    %v106 = vld [vmem:[#allocation8 + $0x44] sm:$0xf]
    %v107 = vld [vmem:[#allocation8 + $0x48] sm:$0xff]
    %v108 = vld [vmem:[#allocation8 + $0x50] sm:$0xf]
    %v109 = vld [vmem:[#allocation8 + $0x54] sm:$0xff]
    %v110 = vld [vmem:[#allocation8 + $0x5c] sm:$0xf]
    %v111 = vld [vmem:[#allocation8 + $0x60] sm:$0xff]
    %v112 = vld [vmem:[#allocation8 + $0x68] sm:$0xf]
    %v113 = vld [vmem:[#allocation8 + $0x6c] sm:$0xff]
    %v114 = vld [vmem:[#allocation8 + $0x74] sm:$0xf]
    %v115 = vld [vmem:[#allocation8 + $0x78] sm:$0xff]
    %v116 = vld [vmem:[#allocation8 + $0x80] sm:$0xf]
    %v117 = vld [vmem:[#allocation8 + $0x84] sm:$0xff]
    %v118 = vld [vmem:[#allocation8 + $0x8c] sm:$0xf]
    %v119 = vld [vmem:[#allocation8 + $0x90] sm:$0xff]
    %v120 = vld [vmem:[#allocation8 + $0x98] sm:$0xf]
    %v121 = vld [vmem:[#allocation8 + $0x9c] sm:$0xff]
    %v122 = vld [vmem:[#allocation8 + $0xa4] sm:$0xf]
    %v123 = vld [vmem:[#allocation8 + $0xa8] sm:$0xff]
    %v124 = vld [vmem:[#allocation8 + $0xb0] sm:$0xf]
    %v125 = vld [vmem:[#allocation8 + $0xb4] sm:$0xff]
    %v126 = vld [vmem:[#allocation8 + $0xbc] sm:$0xf]
    %v127 = vld [vmem:[%s2] sm:$0x7]
    %v129 = vlaneseq
    %v130 = vshrl.u32 %v129, 7
    %v131 = vsub.s32 0, %v130
    %v132 = vrot.slane %v127, %v131
    %v133 = vlaneseq
    %v134 = vshrl.u32 %v133, 7
    %v135 = vsub.s32 1, %v134
    %v136 = vrot.slane %v127, %v135
    %v137 = vlaneseq
    %v138 = vshrl.u32 %v137, 7
    %v139 = vsub.s32 2, %v138
    %v140 = vrot.slane %v127, %v139
    %v176 = vunpack.c.l.b16 %v95
    %v177 = vunpack.c.h.b16 %v95
    %v178 = vunpack.c.l.b16 %v96
    %v179 = vunpack.c.l.b16 %v97
    %v180 = vunpack.c.h.b16 %v97
    %v181 = vunpack.c.l.b16 %v98
    %v182 = vunpack.c.l.b16 %v99
    %v183 = vunpack.c.h.b16 %v99
    %v184 = vunpack.c.l.b16 %v100
    %v185 = vunpack.c.l.b16 %v101
    %v186 = vunpack.c.h.b16 %v101
    %v187 = vunpack.c.l.b16 %v102
    %v188 = vunpack.c.l.b16 %v103
    %v189 = vunpack.c.h.b16 %v103
    %v190 = vunpack.c.l.b16 %v104
    %v191 = vunpack.c.l.b16 %v105
    %v192 = vunpack.c.h.b16 %v105
    %v193 = vunpack.c.l.b16 %v106
    %v194 = vunpack.c.l.b16 %v107
    %v195 = vunpack.c.h.b16 %v107
    %v196 = vunpack.c.l.b16 %v108
    %v197 = vunpack.c.l.b16 %v109
    %v198 = vunpack.c.h.b16 %v109
    %v199 = vunpack.c.l.b16 %v110
    %v200 = vunpack.c.l.b16 %v111
    %v201 = vunpack.c.h.b16 %v111
    %v202 = vunpack.c.l.b16 %v112
    %v203 = vunpack.c.l.b16 %v113
    %v204 = vunpack.c.h.b16 %v113
    %v205 = vunpack.c.l.b16 %v114
    %v206 = vunpack.c.l.b16 %v115
    %v207 = vunpack.c.h.b16 %v115
    %v208 = vunpack.c.l.b16 %v116
    %v209 = vunpack.c.l.b16 %v117
    %v210 = vunpack.c.h.b16 %v117
    %v211 = vunpack.c.l.b16 %v118
    %v212 = vunpack.c.l.b16 %v119
    %v213 = vunpack.c.h.b16 %v119
    %v214 = vunpack.c.l.b16 %v120
    %v215 = vunpack.c.l.b16 %v121
    %v216 = vunpack.c.h.b16 %v121
    %v217 = vunpack.c.l.b16 %v122
    %v218 = vunpack.c.l.b16 %v123
    %v219 = vunpack.c.h.b16 %v123
    %v220 = vunpack.c.l.b16 %v124
    %v221 = vunpack.c.l.b16 %v125
    %v222 = vunpack.c.h.b16 %v125
    %v223 = vunpack.c.l.b16 %v126
    %v224 = vpack.c.b16 %v179, %v176
    %v225 = vpack.c.b16 %v180, %v177
    %v226 = vpack.c.b16 %v181, %v178
    %v227 = vpack.c.b16 %v185, %v182
    %v228 = vpack.c.b16 %v186, %v183
    %v229 = vpack.c.b16 %v187, %v184
    %v230 = vpack.c.b16 %v191, %v188
    %v231 = vpack.c.b16 %v192, %v189
    %v232 = vpack.c.b16 %v193, %v190
    %v233 = vpack.c.b16 %v197, %v194
    %v234 = vpack.c.b16 %v198, %v195
    %v235 = vpack.c.b16 %v199, %v196
    %v236 = vpack.c.b16 %v203, %v200
    %v237 = vpack.c.b16 %v204, %v201
    %v238 = vpack.c.b16 %v205, %v202
    %v239 = vpack.c.b16 %v209, %v206
    %v240 = vpack.c.b16 %v210, %v207
    %v241 = vpack.c.b16 %v211, %v208
    %v242 = vpack.c.b16 %v215, %v212
    %v243 = vpack.c.b16 %v216, %v213
    %v244 = vpack.c.b16 %v217, %v214
    %v245 = vpack.c.b16 %v221, %v218
    %v246 = vpack.c.b16 %v222, %v219
    %v247 = vpack.c.b16 %v223, %v220
    %272 = vmatprep.subr.bf16.mxu0 %v225
    %273 = vmatpush1.bf16.msra.mxu0 %v224
    %274 = vmatprep.subr.bf16.mxu0 %v228
    %275 = vmatpush1.bf16.msra.mxu0 %v227
    %276 = vmatprep.subr.bf16.mxu0 %v231
    %277 = vmatpush1.bf16.msra.mxu0 %v230
    %278 = vmatprep.subr.bf16.mxu0 %v234
    %279 = vmatpush1.bf16.msra.mxu0 %v233
    %280 = vmatprep.subr.bf16.mxu0 %v237
    %281 = vmatpush1.bf16.msra.mxu0 %v236
    %282 = vmatprep.subr.bf16.mxu0 %v240
    %283 = vmatpush1.bf16.msra.mxu0 %v239
    %284 = vmatprep.subr.bf16.mxu0 %v243
    %285 = vmatpush1.bf16.msra.mxu0 %v242
    %286 = vmatprep.subr.bf16.mxu0 %v246
    %287 = vmatpush1.bf16.msra.mxu0 %v245
    %288 = vmatprep.subr.bf16.mxu0 0
    %289 = vmatpush1.bf16.msra.mxu0 0
    %290 = vmatprep.subr.bf16.mxu0 0
    %291 = vmatpush1.bf16.msra.mxu0 0
    %292 = vmatprep.subr.bf16.mxu0 0
    %293 = vmatpush1.bf16.msra.mxu0 0
    %294 = vmatprep.subr.bf16.mxu0 0
    %295 = vmatpush1.bf16.msra.mxu0 0
    %296 = vmatprep.subr.bf16.mxu0 0
    %297 = vmatpush1.bf16.msra.mxu0 0
    %298 = vmatprep.subr.bf16.mxu0 0
    %299 = vmatpush1.bf16.msra.mxu0 0
    %300 = vmatprep.subr.bf16.mxu0 0
    %301 = vmatpush1.bf16.msra.mxu0 0
    %302 = vmatprep.subr.bf16.mxu0 0
    %303 = vmatpush1.bf16.msra.mxu0 0
    %304 = vmatprep.mubr.bf16.mxu0 0
    %305 = vmatmul.mubr.bf16.gmra.mrb[0].mxu0 %v94
    %v306 = vpop.f32.mrb[0].mxu0
    %v307 = vadd.f32 %v132, %v306
    %v308 = vpop.f32.mrb[0].mxu0
    %v309 = vadd.f32 %v136, %v308
    %v310 = vpop.f32.mrb[0].mxu0
    %v311 = vpop.f32.mrb[0].mxu0
    %312 = vdwg.mxu0
    %313 = vmatprep.subr.bf16.mxu0 0
    %314 = vmatpush1.bf16.msra.mxu0 %v226
    %315 = vmatprep.subr.bf16.mxu0 0
    %316 = vmatpush1.bf16.msra.mxu0 %v229
    %317 = vmatprep.subr.bf16.mxu0 0
    %318 = vmatpush1.bf16.msra.mxu0 %v232
    %319 = vmatprep.subr.bf16.mxu0 0
    %320 = vmatpush1.bf16.msra.mxu0 %v235
    %321 = vmatprep.subr.bf16.mxu0 0
    %322 = vmatpush1.bf16.msra.mxu0 %v238
    %323 = vmatprep.subr.bf16.mxu0 0
    %324 = vmatpush1.bf16.msra.mxu0 %v241
    %325 = vmatprep.subr.bf16.mxu0 0
    %326 = vmatpush1.bf16.msra.mxu0 %v244
    %327 = vmatprep.subr.bf16.mxu0 0
    %328 = vmatpush1.bf16.msra.mxu0 %v247
    %329 = vmatprep.subr.bf16.mxu0 0
    %330 = vmatpush1.bf16.msra.mxu0 0
    %331 = vmatprep.subr.bf16.mxu0 0
    %332 = vmatpush1.bf16.msra.mxu0 0
    %333 = vmatprep.subr.bf16.mxu0 0
    %334 = vmatpush1.bf16.msra.mxu0 0
    %335 = vmatprep.subr.bf16.mxu0 0
    %336 = vmatpush1.bf16.msra.mxu0 0
    %337 = vmatprep.subr.bf16.mxu0 0
    %338 = vmatpush1.bf16.msra.mxu0 0
    %339 = vmatprep.subr.bf16.mxu0 0
    %340 = vmatpush1.bf16.msra.mxu0 0
    %341 = vmatprep.subr.bf16.mxu0 0
    %342 = vmatpush1.bf16.msra.mxu0 0
    %343 = vmatprep.subr.bf16.mxu0 0
    %344 = vmatpush1.bf16.msra.mxu0 0
    %345 = vmatprep.mubr.bf16.mxu0 0
    %346 = vmatmul.mubr.bf16.gmra.mrb[0].mxu0 %v94
    %v347 = vpop.f32.mrb[0].mxu0
    %v348 = vadd.f32 %v140, %v347
    %v349 = vpop.f32.mrb[0].mxu0
    %v350 = vpop.f32.mrb[0].mxu0
    %v351 = vpop.f32.mrb[0].mxu0
    %352 = vdwg.mxu0
    %s353 = sld [smem:[#allocation3]]
    %vm354 = vcmp.ge.f32.partialorder %v307, 0.0
    %vm355 = vcmp.ge.f32.partialorder %v309, 0.0
    %vm356 = vcmp.ge.f32.partialorder %v348, 0.0
    %v357 = vstv %s353
    %v358 = vmul.f32 %v357, %v307
    %v359 = vmul.f32 %v357, %v309
    %v360 = vmul.f32 %v357, %v348
    %v361 = vsel %vm354, %v307, %v358
    %v362 = vsel %vm355, %v309, %v359
    %v363 = vsel %vm356, %v348, %v360
    %v364 = vpack.c.bf16 %v361, %v361
    %v365 = vpack.c.bf16 %v362, %v362
    %v366 = vpack.c.bf16 %v363, %v363
    %v367 = vld [vmem:[#allocation10] sm:$0xf]
    %v368 = vld [vmem:[#allocation10 + $0x4] sm:$0xf]
    %v369 = vld [vmem:[#allocation10 + $0x8] sm:$0xf]
    %v370 = vld [vmem:[#allocation10 + $0xc] sm:$0xf]
    %v371 = vld [vmem:[#allocation10 + $0x10] sm:$0xf]
    %v372 = vld [vmem:[#allocation10 + $0x14] sm:$0xf]
    %v373 = vld [vmem:[#allocation10 + $0x18] sm:$0xf]
    %v374 = vld [vmem:[#allocation10 + $0x1c] sm:$0xf]
    %v375 = vld [vmem:[#allocation10 + $0x20] sm:$0xf]
    %v376 = vld [vmem:[#allocation10 + $0x24] sm:$0xf]
    %v377 = vld [vmem:[#allocation10 + $0x28] sm:$0xf]
    %v378 = vld [vmem:[#allocation10 + $0x2c] sm:$0xf]
    %v379 = vld [vmem:[#allocation10 + $0x30] sm:$0xf]
    %v380 = vld [vmem:[#allocation10 + $0x34] sm:$0xf]
    %v381 = vld [vmem:[#allocation10 + $0x38] sm:$0xf]
    %v382 = vld [vmem:[#allocation10 + $0x3c] sm:$0xf]
    %v383 = vld [vmem:[#allocation10 + $0x40] sm:$0xf]
    %v384 = vld [vmem:[#allocation10 + $0x44] sm:$0xf]
    %v385 = vld [vmem:[#allocation10 + $0x48] sm:$0xf]
    %v386 = vld [vmem:[#allocation10 + $0x4c] sm:$0xf]
    %v387 = vld [vmem:[#allocation10 + $0x50] sm:$0xf]
    %v388 = vld [vmem:[#allocation10 + $0x54] sm:$0xf]
    %v389 = vld [vmem:[#allocation10 + $0x58] sm:$0xf]
    %v390 = vld [vmem:[#allocation10 + $0x5c] sm:$0xf]
    %v391 = vld [vmem:[#allocation10 + $0x60] sm:$0xf]
    %v392 = vld [vmem:[#allocation10 + $0x64] sm:$0xf]
    %v393 = vld [vmem:[#allocation10 + $0x68] sm:$0xf]
    %v394 = vld [vmem:[#allocation10 + $0x6c] sm:$0xf]
    %v395 = vld [vmem:[#allocation10 + $0x70] sm:$0xf]
    %v396 = vld [vmem:[#allocation10 + $0x74] sm:$0xf]
    %v397 = vld [vmem:[#allocation10 + $0x78] sm:$0xf]
    %v398 = vld [vmem:[#allocation10 + $0x7c] sm:$0xf]
    %v399 = vld [vmem:[#allocation10 + $0x80] sm:$0xf]
    %v400 = vld [vmem:[#allocation10 + $0x84] sm:$0xf]
    %v401 = vld [vmem:[#allocation10 + $0x88] sm:$0xf]
    %v402 = vld [vmem:[#allocation10 + $0x8c] sm:$0xf]
    %v403 = vld [vmem:[#allocation10 + $0x90] sm:$0xf]
    %v404 = vld [vmem:[#allocation10 + $0x94] sm:$0xf]
    %v405 = vld [vmem:[#allocation10 + $0x98] sm:$0xf]
    %v406 = vld [vmem:[#allocation10 + $0x9c] sm:$0xf]
    %v407 = vld [vmem:[#allocation10 + $0xa0] sm:$0xf]
    %v408 = vld [vmem:[#allocation10 + $0xa4] sm:$0xf]
    %v409 = vld [vmem:[#allocation10 + $0xa8] sm:$0xf]
    %v410 = vld [vmem:[#allocation10 + $0xac] sm:$0xf]
    %v411 = vld [vmem:[#allocation10 + $0xb0] sm:$0xf]
    %v412 = vld [vmem:[#allocation10 + $0xb4] sm:$0xf]
    %v413 = vld [vmem:[#allocation10 + $0xb8] sm:$0xf]
    %v414 = vld [vmem:[#allocation10 + $0xbc] sm:$0xf]
    %v415 = vld [vmem:[%s4] sm:$0x1]
    %v417 = vlaneseq
    %v418 = vshrl.u32 %v417, 7
    %v419 = vsub.s32 0, %v418
    %v420 = vrot.slane %v415, %v419
    %v470 = vunpack.c.l.b16 %v367
    %v471 = vunpack.c.l.b16 %v368
    %v472 = vunpack.c.l.b16 %v369
    %v473 = vunpack.c.l.b16 %v370
    %v474 = vunpack.c.l.b16 %v371
    %v475 = vunpack.c.l.b16 %v372
    %v476 = vunpack.c.l.b16 %v373
    %v477 = vunpack.c.l.b16 %v374
    %v478 = vunpack.c.l.b16 %v375
    %v479 = vunpack.c.l.b16 %v376
    %v480 = vunpack.c.l.b16 %v377
    %v481 = vunpack.c.l.b16 %v378
    %v482 = vunpack.c.l.b16 %v379
    %v483 = vunpack.c.l.b16 %v380
    %v484 = vunpack.c.l.b16 %v381
    %v485 = vunpack.c.l.b16 %v382
    %v486 = vunpack.c.l.b16 %v383
    %v487 = vunpack.c.l.b16 %v384
    %v488 = vunpack.c.l.b16 %v385
    %v489 = vunpack.c.l.b16 %v386
    %v490 = vunpack.c.l.b16 %v387
    %v491 = vunpack.c.l.b16 %v388
    %v492 = vunpack.c.l.b16 %v389
    %v493 = vunpack.c.l.b16 %v390
    %v494 = vunpack.c.l.b16 %v391
    %v495 = vunpack.c.l.b16 %v392
    %v496 = vunpack.c.l.b16 %v393
    %v497 = vunpack.c.l.b16 %v394
    %v498 = vunpack.c.l.b16 %v395
    %v499 = vunpack.c.l.b16 %v396
    %v500 = vunpack.c.l.b16 %v397
    %v501 = vunpack.c.l.b16 %v398
    %v502 = vunpack.c.l.b16 %v399
    %v503 = vunpack.c.l.b16 %v400
    %v504 = vunpack.c.l.b16 %v401
    %v505 = vunpack.c.l.b16 %v402
    %v506 = vunpack.c.l.b16 %v403
    %v507 = vunpack.c.l.b16 %v404
    %v508 = vunpack.c.l.b16 %v405
    %v509 = vunpack.c.l.b16 %v406
    %v510 = vunpack.c.l.b16 %v407
    %v511 = vunpack.c.l.b16 %v408
    %v512 = vunpack.c.l.b16 %v409
    %v513 = vunpack.c.l.b16 %v410
    %v514 = vunpack.c.l.b16 %v411
    %v515 = vunpack.c.l.b16 %v412
    %v516 = vunpack.c.l.b16 %v413
    %v517 = vunpack.c.l.b16 %v414
    %v518 = vpack.c.b16 %v471, %v470
    %v519 = vpack.c.b16 %v473, %v472
    %v520 = vpack.c.b16 %v475, %v474
    %v521 = vpack.c.b16 %v477, %v476
    %v522 = vpack.c.b16 %v479, %v478
    %v523 = vpack.c.b16 %v481, %v480
    %v524 = vpack.c.b16 %v483, %v482
    %v525 = vpack.c.b16 %v485, %v484
    %v526 = vpack.c.b16 %v487, %v486
    %v527 = vpack.c.b16 %v489, %v488
    %v528 = vpack.c.b16 %v491, %v490
    %v529 = vpack.c.b16 %v493, %v492
    %v530 = vpack.c.b16 %v495, %v494
    %v531 = vpack.c.b16 %v497, %v496
    %v532 = vpack.c.b16 %v499, %v498
    %v533 = vpack.c.b16 %v501, %v500
    %v534 = vpack.c.b16 %v503, %v502
    %v535 = vpack.c.b16 %v505, %v504
    %v536 = vpack.c.b16 %v507, %v506
    %v537 = vpack.c.b16 %v509, %v508
    %v538 = vpack.c.b16 %v511, %v510
    %v539 = vpack.c.b16 %v513, %v512
    %v540 = vpack.c.b16 %v515, %v514
    %v541 = vpack.c.b16 %v517, %v516
    %566 = vmatprep.subr.bf16.mxu0 0
    %567 = vmatpush1.bf16.msra.mxu0 %v518
    %568 = vmatprep.subr.bf16.mxu0 0
    %569 = vmatpush1.bf16.msra.mxu0 %v519
    %570 = vmatprep.subr.bf16.mxu0 0
    %571 = vmatpush1.bf16.msra.mxu0 %v520
    %572 = vmatprep.subr.bf16.mxu0 0
    %573 = vmatpush1.bf16.msra.mxu0 %v521
    %574 = vmatprep.subr.bf16.mxu0 0
    %575 = vmatpush1.bf16.msra.mxu0 %v522
    %576 = vmatprep.subr.bf16.mxu0 0
    %577 = vmatpush1.bf16.msra.mxu0 %v523
    %578 = vmatprep.subr.bf16.mxu0 0
    %579 = vmatpush1.bf16.msra.mxu0 %v524
    %580 = vmatprep.subr.bf16.mxu0 0
    %581 = vmatpush1.bf16.msra.mxu0 %v525
    %582 = vmatprep.subr.bf16.mxu0 0
    %583 = vmatpush1.bf16.msra.mxu0 %v526
    %584 = vmatprep.subr.bf16.mxu0 0
    %585 = vmatpush1.bf16.msra.mxu0 %v527
    %586 = vmatprep.subr.bf16.mxu0 0
    %587 = vmatpush1.bf16.msra.mxu0 %v528
    %588 = vmatprep.subr.bf16.mxu0 0
    %589 = vmatpush1.bf16.msra.mxu0 %v529
    %590 = vmatprep.subr.bf16.mxu0 0
    %591 = vmatpush1.bf16.msra.mxu0 %v530
    %592 = vmatprep.subr.bf16.mxu0 0
    %593 = vmatpush1.bf16.msra.mxu0 %v531
    %594 = vmatprep.subr.bf16.mxu0 0
    %595 = vmatpush1.bf16.msra.mxu0 %v532
    %596 = vmatprep.subr.bf16.mxu0 0
    %597 = vmatpush1.bf16.msra.mxu0 %v533
    %598 = vmatprep.mubr.bf16.mxu0 %v365
    %599 = vmatmul.mubr.bf16.gmra.mrb[0].mxu0 %v364
    %v600 = vpop.f32.mrb[0].mxu0
    %v601 = vadd.f32 %v420, %v600
    %v602 = vpop.f32.mrb[0].mxu0
    %v603 = vpop.f32.mrb[0].mxu0
    %v604 = vpop.f32.mrb[0].mxu0
    %605 = vdwg.mxu0
    %606 = vmatprep.subr.bf16.mxu0 0
    %607 = vmatpush1.bf16.msra.mxu0 %v534
    %608 = vmatprep.subr.bf16.mxu0 0
    %609 = vmatpush1.bf16.msra.mxu0 %v535
    %610 = vmatprep.subr.bf16.mxu0 0
    %611 = vmatpush1.bf16.msra.mxu0 %v536
    %612 = vmatprep.subr.bf16.mxu0 0
    %613 = vmatpush1.bf16.msra.mxu0 %v537
    %614 = vmatprep.subr.bf16.mxu0 0
    %615 = vmatpush1.bf16.msra.mxu0 %v538
    %616 = vmatprep.subr.bf16.mxu0 0
    %617 = vmatpush1.bf16.msra.mxu0 %v539
    %618 = vmatprep.subr.bf16.mxu0 0
    %619 = vmatpush1.bf16.msra.mxu0 %v540
    %620 = vmatprep.subr.bf16.mxu0 0
    %621 = vmatpush1.bf16.msra.mxu0 %v541
    %622 = vmatprep.subr.bf16.mxu0 0
    %623 = vmatpush1.bf16.msra.mxu0 0
    %624 = vmatprep.subr.bf16.mxu0 0
    %625 = vmatpush1.bf16.msra.mxu0 0
    %626 = vmatprep.subr.bf16.mxu0 0
    %627 = vmatpush1.bf16.msra.mxu0 0
    %628 = vmatprep.subr.bf16.mxu0 0
    %629 = vmatpush1.bf16.msra.mxu0 0
    %630 = vmatprep.subr.bf16.mxu0 0
    %631 = vmatpush1.bf16.msra.mxu0 0
    %632 = vmatprep.subr.bf16.mxu0 0
    %633 = vmatpush1.bf16.msra.mxu0 0
    %634 = vmatprep.subr.bf16.mxu0 0
    %635 = vmatpush1.bf16.msra.mxu0 0
    %636 = vmatprep.subr.bf16.mxu0 0
    %637 = vmatpush1.bf16.msra.mxu0 0
    %638 = vmatprep.mubr.bf16.mxu0 0
    %639 = vmatmul.mubr.bf16.gmra.mrb[0].mxu0 %v366
    %v640 = vpop.f32.mrb[0].mxu0
    %v641 = vadd.f32 %v601, %v640
    %v642 = vpop.f32.mrb[0].mxu0
    %v643 = vpop.f32.mrb[0].mxu0
    %v644 = vpop.f32.mrb[0].mxu0
    %645 = vdwg.mxu0
    %s646 = sld [smem:[#allocation4]]
    %vm647 = vcmp.ge.f32.partialorder %v641, 0.0
    %v648 = vstv %s646
    %v649 = vmul.f32 %v648, %v641
    %v650 = vsel %vm647, %v641, %v649
    %v651 = vpack.c.bf16 %v650, %v650
    %v652 = vld [vmem:[#allocation11] sm:$0xf]
    %v653 = vld [vmem:[#allocation11 + $0x4] sm:$0xf]
    %v654 = vld [vmem:[#allocation11 + $0x8] sm:$0xf]
    %v655 = vld [vmem:[#allocation11 + $0xc] sm:$0xf]
    %v656 = vld [vmem:[#allocation11 + $0x10] sm:$0xf]
    %v657 = vld [vmem:[#allocation11 + $0x14] sm:$0xf]
    %v658 = vld [vmem:[#allocation11 + $0x18] sm:$0xf]
    %v659 = vld [vmem:[#allocation11 + $0x1c] sm:$0xf]
    %v660 = vld [vmem:[#allocation11 + $0x20] sm:$0xf]
    %v661 = vld [vmem:[#allocation11 + $0x24] sm:$0xf]
    %v662 = vld [vmem:[#allocation11 + $0x28] sm:$0xf]
    %v663 = vld [vmem:[#allocation11 + $0x2c] sm:$0xf]
    %v664 = vld [vmem:[#allocation11 + $0x30] sm:$0xf]
    %v665 = vld [vmem:[#allocation11 + $0x34] sm:$0xf]
    %v666 = vld [vmem:[#allocation11 + $0x38] sm:$0xf]
    %v667 = vld [vmem:[#allocation11 + $0x3c] sm:$0xf]
    %v668 = vld [vmem:[%s6] sm:$0x1]
    %v670 = vlaneseq
    %v671 = vshrl.u32 %v670, 7
    %v672 = vsub.s32 0, %v671
    %v673 = vrot.slane %v668, %v672
    %v691 = vunpack.c.l.b16 %v652
    %v692 = vunpack.c.l.b16 %v653
    %v693 = vunpack.c.l.b16 %v654
    %v694 = vunpack.c.l.b16 %v655
    %v695 = vunpack.c.l.b16 %v656
    %v696 = vunpack.c.l.b16 %v657
    %v697 = vunpack.c.l.b16 %v658
    %v698 = vunpack.c.l.b16 %v659
    %v699 = vunpack.c.l.b16 %v660
    %v700 = vunpack.c.l.b16 %v661
    %v701 = vunpack.c.l.b16 %v662
    %v702 = vunpack.c.l.b16 %v663
    %v703 = vunpack.c.l.b16 %v664
    %v704 = vunpack.c.l.b16 %v665
    %v705 = vunpack.c.l.b16 %v666
    %v706 = vunpack.c.l.b16 %v667
    %v707 = vpack.c.b16 %v692, %v691
    %v708 = vpack.c.b16 %v694, %v693
    %v709 = vpack.c.b16 %v696, %v695
    %v710 = vpack.c.b16 %v698, %v697
    %v711 = vpack.c.b16 %v700, %v699
    %v712 = vpack.c.b16 %v702, %v701
    %v713 = vpack.c.b16 %v704, %v703
    %v714 = vpack.c.b16 %v706, %v705
    %723 = vmatprep.subr.bf16.mxu0 0
    %724 = vmatpush1.bf16.msra.mxu0 %v707
    %725 = vmatprep.subr.bf16.mxu0 0
    %726 = vmatpush1.bf16.msra.mxu0 %v708
    %727 = vmatprep.subr.bf16.mxu0 0
    %728 = vmatpush1.bf16.msra.mxu0 %v709
    %729 = vmatprep.subr.bf16.mxu0 0
    %730 = vmatpush1.bf16.msra.mxu0 %v710
    %731 = vmatprep.subr.bf16.mxu0 0
    %732 = vmatpush1.bf16.msra.mxu0 %v711
    %733 = vmatprep.subr.bf16.mxu0 0
    %734 = vmatpush1.bf16.msra.mxu0 %v712
    %735 = vmatprep.subr.bf16.mxu0 0
    %736 = vmatpush1.bf16.msra.mxu0 %v713
    %737 = vmatprep.subr.bf16.mxu0 0
    %738 = vmatpush1.bf16.msra.mxu0 %v714
    %739 = vmatprep.subr.bf16.mxu0 0
    %740 = vmatpush1.bf16.msra.mxu0 0
    %741 = vmatprep.subr.bf16.mxu0 0
    %742 = vmatpush1.bf16.msra.mxu0 0
    %743 = vmatprep.subr.bf16.mxu0 0
    %744 = vmatpush1.bf16.msra.mxu0 0
    %745 = vmatprep.subr.bf16.mxu0 0
    %746 = vmatpush1.bf16.msra.mxu0 0
    %747 = vmatprep.subr.bf16.mxu0 0
    %748 = vmatpush1.bf16.msra.mxu0 0
    %749 = vmatprep.subr.bf16.mxu0 0
    %750 = vmatpush1.bf16.msra.mxu0 0
    %751 = vmatprep.subr.bf16.mxu0 0
    %752 = vmatpush1.bf16.msra.mxu0 0
    %753 = vmatprep.subr.bf16.mxu0 0
    %754 = vmatpush1.bf16.msra.mxu0 0
    %755 = vmatprep.mubr.bf16.mxu0 0
    %756 = vmatmul.mubr.bf16.gmra.mrb[0].mxu0 %v651
    %v757 = vpop.f32.mrb[0].mxu0
    %v758 = vadd.f32 %v673, %v757
    %v759 = vpop.f32.mrb[0].mxu0
    %v760 = vpop.f32.mrb[0].mxu0
    %v761 = vpop.f32.mrb[0].mxu0
    %762 = vdwg.mxu0
    %763 = vmax.xlane.f32.xlu0 %v758
    %v764 = vpop.xlane.xlu0 %763
    %v765 = vsub.f32 %v758, %v764
    %v766 = vmul.f32 %v765, 1.442695
    %v767 = vpow.pop %v766
    %768 = vadd.xlane.f32.xlu0 %v767
    %v769 = vpop.xlane.xlu0 %768
    %v770 = vrcp.pop %v769
    %v771 = vmul.f32 %v767, %v770
    %vm772 = vcmask 261120
    %773 = vst.msk [vmem:[#allocation13] sm:$0xff] %vm772, %v771
    // Predicated region
    $region54: #{coachnet_forward.1} parent=1 // pred_check
      _
    $region55: #{coachnet_forward.1} parent=1 // pred_check_branch
      %775 = sbr.rel (0) target = $region57
    $region56: #{coachnet_forward.1} parent=1 // pred_region
      %s777 = ssub.s32 128, 128
      %778 = vsyncadd [#allocation7], %s777
      %s780 = sshll.u32 [#allocation13], 4
      %s781 = int_to_ptr.vmem [resolvable:$true] %s780
      %783 = dma.vmem_to_hbm [thread:$0]  %s781, 128, %s9, [#allocation7]
    $region57: #{coachnet_forward.1} parent=1 // pred_fallthru
      _
    // Predicated region
    $region58: #{coachnet_forward.1} parent=1 // pred_check
      _
    $region59: #{coachnet_forward.1} parent=1 // pred_check_branch
      %785 = sbr.rel (0) target = $region61
    $region60: #{coachnet_forward.1} parent=1 // pred_region
      %786 = dma.done [#allocation7], 128
    $region61: #{coachnet_forward.1} parent=1 // pred_fallthru
      _
    %787 = vsyncpa [#allocation6], 1
    %788 = vsyncpa [#allocation9], 1
    %789 = vsyncpa [#allocation12], 1
    %790 = vsyncpa [#allocation7], 1

</llo_original>
